<compile_context>
chip_gen: v5e
topology: v5e:2x2
jax: 0.10.0
libtpu: 0.0.40
codegen_flags: <defaults>
</compile_context>

<pallas_src>
import functools

import jax
import jax.numpy as jnp
from jax.experimental import pallas as pl
from jax.experimental.pallas import tpu as pltpu


def _cdiv(a: int, b: int) -> int:
    return (a + b - 1) // b


def _round_up(a: int, m: int) -> int:
    return _cdiv(a, m) * m


def _round_down(a: int, m: int) -> int:
    return (a // m) * m


def _target_block_bytes() -> int:
    """~4 MiB input blocks everywhere; ~8 MiB on 128-MiB-VMEM parts (v5e/v6e)."""
    try:
        info = pltpu.get_tpu_info()
        vmem = int(getattr(info, "vmem_capacity_bytes", 0) or 0)
        if vmem >= 128 * 1024 * 1024:
            return 8 * 1024 * 1024
    except Exception:
        pass
    return 4 * 1024 * 1024


# ---------------------------------------------------------------------------
# Kernels
# ---------------------------------------------------------------------------

def _gap_single_kernel(x_ref, o_ref, *, spatial: int):
    """Single reduction step: cb == S (full spatial extent in one block)."""
    x = x_ref[...].astype(jnp.float32)                       # (rb, S)
    o_ref[...] = (jnp.sum(x, axis=1, keepdims=True) *
                  jnp.float32(1.0 / spatial)).astype(o_ref.dtype)


def _gap_multi_kernel(x_ref, o_ref, acc_ref, *, spatial: int, col_block: int,
                      n_col: int, mask_last: bool):
    """Accumulate across the column (spatial) grid axis.

    acc_ref: (rb, 128) f32 lane-dense accumulator.  Steady state is pure
    full-width VPU adds (no XLU reduce, no 1-lane masked stores); the single
    cross-lane reduce + 1/S scale happens only on the last column step.
    """
    j = pl.program_id(1)

    @pl.when(j == 0)
    def _():
        acc_ref[...] = jnp.zeros_like(acc_ref)

    def accumulate(x):
        # x: (rb, cb) f32 with cb % 128 == 0.  Lane-aligned 128-wide chunks:
        # one vreg-wide add per input vreg, no cross-lane movement.
        s = acc_ref[...]
        for k in range(x.shape[1] // 128):
            s = s + x[:, k * 128:(k + 1) * 128]
        acc_ref[...] = s

    if mask_last:
        last = n_col - 1

        @pl.when(j < last)
        def _():
            accumulate(x_ref[...].astype(jnp.float32))

        @pl.when(j == last)
        def _():
            x = x_ref[...].astype(jnp.float32)
            col_ids = last * col_block + jax.lax.broadcasted_iota(
                jnp.int32, x.shape, 1)
            # NaN-safe select (do NOT replace with a 0/1 multiply).
            accumulate(jnp.where(col_ids < spatial, x, jnp.float32(0.0)))
    else:
        accumulate(x_ref[...].astype(jnp.float32))

    @pl.when(j == n_col - 1)
    def _():
        total = jnp.sum(acc_ref[...], axis=1, keepdims=True)          # (rb, 1)
        o_ref[...] = (total * jnp.float32(1.0 / spatial)).astype(o_ref.dtype)


# ---------------------------------------------------------------------------
# Wrapper
# ---------------------------------------------------------------------------

def global_avg_pool(x: jax.Array) -> jax.Array:
    """Equivalent of F.adaptive_avg_pool2d(x, (1, 1)) for NCHW input."""
    N, C, H, W = x.shape
    R = N * C
    S = H * W
    x2d = x.reshape(R, S)

    itemsize = jnp.dtype(x.dtype).itemsize
    row_align = max(8, 32 // itemsize)           # sublane packing: 8 / 16 / 32
    target_bytes = _target_block_bytes()

    # Column (reduction) blocking: keep bytes-per-row-chunk <= 8 KiB so the
    # byte-targeted rb lands around 512-1024; cb is a multiple of 128 when
    # the spatial extent is actually blocked.
    cb_max = max(128, _round_down(8192 // itemsize, 128))   # 2048/4096/8192
    if S <= cb_max:
        cb, n_col, mask_last = S, 1, False       # full extent -> always legal
    else:
        cb = cb_max
        n_col = _cdiv(S, cb)
        mask_last = (n_col * cb != S)

    # Row blocking: byte-target the *VMEM* (lane-padded) block footprint and
    # keep >=2 row blocks whenever legally possible (v7x megacore).
    cb_vmem_bytes = _round_up(cb, 128) * itemsize
    rb_target = _round_up(max(target_bytes // cb_vmem_bytes, row_align),
                          row_align)
    if R <= 2 * row_align:
        rb = R                                   # full extent (always legal)
    else:
        rb = min(rb_target, _round_up(_cdiv(R, 2), row_align))
    n_row = _cdiv(R, rb)
    # Partial trailing row block: input reads past row R produce garbage only
    # in output rows >= R (per-row reduction), which are sliced off below.
    r_pad = n_row * rb

    cost = pl.CostEstimate(
        flops=2 * R * S,
        transcendentals=0,
        bytes_accessed=R * S * itemsize + R * itemsize,
    )

    if n_col == 1:
        kernel = functools.partial(_gap_single_kernel, spatial=S)
        grid_spec = pltpu.PrefetchScalarGridSpec(
            num_scalar_prefetch=0,
            grid=(n_row,),
            in_specs=[pl.BlockSpec((rb, cb), lambda i: (i, 0))],
            out_specs=pl.BlockSpec((rb, 1), lambda i: (i, 0)),
        )
        dim_sem = ("parallel",)
    else:
        kernel = functools.partial(
            _gap_multi_kernel, spatial=S, col_block=cb, n_col=n_col,
            mask_last=mask_last)
        grid_spec = pltpu.PrefetchScalarGridSpec(
            num_scalar_prefetch=0,
            grid=(n_row, n_col),
            in_specs=[pl.BlockSpec((rb, cb), lambda i, j: (i, j))],
            out_specs=pl.BlockSpec((rb, 1), lambda i, j: (i, 0)),
            scratch_shapes=[pltpu.VMEM((rb, 128), jnp.float32)],
        )
        dim_sem = ("parallel", "arbitrary")

    out2d = pl.pallas_call(
        kernel,
        out_shape=jax.ShapeDtypeStruct((r_pad, 1), x.dtype),
        grid_spec=grid_spec,
        compiler_params=pltpu.CompilerParams(
            dimension_semantics=dim_sem,
            vmem_limit_bytes=32 * 1024 * 1024,
        ),
        cost_estimate=cost,
    )(x2d)

    return out2d[:R].reshape(N, C, 1, 1)


class GlobalAvgPool:
    """Mirror of the PyTorch module: forward(x) = adaptive_avg_pool2d(x, (1,1))."""

    def __init__(self):
        pass

    def __call__(self, x):
        return global_avg_pool(x)


if __name__ == "__main__":
    key = jax.random.PRNGKey(0)
    layer = GlobalAvgPool()

    # Primary test: NCHW input at the module's typical small shape.
    x = jax.random.normal(key, (2, 4, 16, 16), dtype=jnp.float32)
    y = jax.block_until_ready(layer(x))
    ref = jnp.mean(x, axis=(2, 3), keepdims=True)
    assert y.shape == (2, 4, 1, 1), y.shape
    assert y.dtype == x.dtype, y.dtype
    assert jnp.allclose(y, ref, rtol=1e-5, atol=1e-5), (
        f"max abs err {float(jnp.max(jnp.abs(y - ref)))}")

    # Secondary sanity check: exercises the multi-column-block path
    # (S = 48*48 = 2304 > cb_max = 2048 -> 2 reduction steps, masked last).
    key2 = jax.random.PRNGKey(1)
    x2 = jax.random.normal(key2, (1, 16, 48, 48), dtype=jnp.float32)
    y2 = jax.block_until_ready(layer(x2))
    ref2 = jnp.mean(x2, axis=(2, 3), keepdims=True)
    assert y2.shape == (1, 16, 1, 1), y2.shape
    assert jnp.allclose(y2, ref2, rtol=1e-5, atol=1e-5), (
        f"max abs err {float(jnp.max(jnp.abs(y2 - ref2)))}")

    print("KERNEL_OK")
</pallas_src>

<mosaic_0001>
module attributes {stable_mosaic.version = 11 : i64} {
  func.func @_gap_single_kernel(%arg0: i32, %arg1: memref<8x256xf32, #tpu.memory_space<vmem>>, %arg2: memref<8x1xf32, #tpu.memory_space<vmem>>) attributes {dimension_semantics = [#tpu.dimension_semantics<parallel>], iteration_bounds = array<i64: 1>, scalar_prefetch = 0 : i64, scratch_operands = 0 : i64, tpu.core_type = #tpu.core_type<tc>, window_params = [{transform_indices = @transform_0, window_bounds = array<i64: 8, 256>}, {transform_indices = @transform_1, window_bounds = array<i64: 8, 1>}]} {
    %c0 = arith.constant 0 : index
    %c0_0 = arith.constant 0 : index
    %0 = vector.load %arg1[%c0, %c0_0] : memref<8x256xf32, #tpu.memory_space<vmem>>, vector<8x256xf32>
    %cst = arith.constant dense<0.000000e+00> : vector<8xf32>
    %1 = vector.multi_reduction <add>, %0, %cst [1] : vector<8x256xf32> to vector<8xf32>
    %2 = vector.shape_cast %1 : vector<8xf32> to vector<8x1xf32>
    %cst_1 = arith.constant 3.906250e-03 : f32
    %3 = vector.broadcast %cst_1 : f32 to vector<8x1xf32>
    %4 = arith.mulf %2, %3 : vector<8x1xf32>
    %c0_2 = arith.constant 0 : index
    %c0_3 = arith.constant 0 : index
    %5 = vector.load %arg2[%c0_2, %c0_3] : memref<8x1xf32, #tpu.memory_space<vmem>>, vector<8x1xf32>
    tpu.vector_store %arg2[%c0_2, %c0_3], %4 {strides = array<i32>} : memref<8x1xf32, #tpu.memory_space<vmem>>, vector<8x1xf32>,
    return
  }
  func.func @transform_0(%arg0: i32) -> (i32, i32) {
    %c0_i32 = arith.constant 0 : i32
    %c0_i32_0 = arith.constant 0 : i32
    return %arg0, %c0_i32 : i32, i32
  }
  func.func @transform_1(%arg0: i32) -> (i32, i32) {
    %c0_i32 = arith.constant 0 : i32
    %c0_i32_0 = arith.constant 0 : i32
    return %arg0, %c0_i32 : i32, i32
  }
}

</mosaic_0001>

<llo_original>
// kernel: tpu_custom_call.1
$region0: #{tpu_custom_call.1}
  #allocation0 [shape = 'u32[]', space=smem, size = 0x4, offset = 0x4, fixed_abs, tag = 'smem constant byte address 0x4 - core index']
  #allocation1 [shape = 'u32[72,128]{1,0:T(1,128)}', space=vmem, size = 0x9000, scoped, tag = 'internal scratch']
  %s0 = inlined_call_operand.hbm [shape: f32[8,256], index: 0, kind: input, shape index: {}]
  %s1 = inlined_call_operand.vmem [shape: f32[8,1], index: 1, kind: output, shape index: {}]
  %s2 = sld [smem:[#allocation0]]
  $region18: #{tpu_custom_call.1} parent=0
    _
  %s4 = ssub.s32 1, %s2
  %s5 = scalar_select 0, %s4, %s2
  $region1: #{tpu_custom_call.1} parent=0
    #allocation2 [shape = 'u8[8192]{0}', space=vmem, size = 0x2000, scoped, tag = 'input window, operand 0, single buffered']
    #allocation3 [shape = 's32[1]{0}', space=sflag, size = 0x4, scoped, tag = 'scoped memory for tpu_custom_call.1']
    %6 = vsyncpa [#allocation3], 0
    // Predicated region
    $region2: #{tpu_custom_call.1} parent=1 // pred_check
      _
    $region3: #{tpu_custom_call.1} parent=1 // pred_check_branch
      %8 = sbr.rel (0) target = $region5
    $region4: #{tpu_custom_call.1} parent=1 // pred_region
      %10 = vsyncadd [#allocation3], 0
      %s12 = sshll.u32 %s0, 4
      %s13 = int_to_ptr.hbm [resolvable:$true] %s12
      %s14 = sshll.u32 [#allocation2], 4
      %s15 = int_to_ptr.vmem [resolvable:$true] %s14
      %17 = dma.hbm_to_vmem [thread:$0]  %s13, 256, %s15, [#allocation3]
    $region5: #{tpu_custom_call.1} parent=1 // pred_fallthru
      _
    // Predicated region
    $region6: #{tpu_custom_call.1} parent=1 // pred_check
      _
    $region7: #{tpu_custom_call.1} parent=1 // pred_check_branch
      %19 = sbr.rel (0) target = $region9
    $region8: #{tpu_custom_call.1} parent=1 // pred_region
      %21 = dma.done [#allocation3], 256
    $region9: #{tpu_custom_call.1} parent=1 // pred_fallthru
      _
    %v22 = vld [vmem:[#allocation2] sm:$0xff]
    %v23 = vld [vmem:[#allocation2 + $0x8] sm:$0xff]
    %v24 = vadd.f32 %v22, %v23
    %25 = vadd.xlane.f32.xlu0 %v24
    %v26 = vpop.xlane.xlu0 %25
    %v27 = vmul.f32 %v26, 0.00390625
    %vm28 = vcmask 7168
    %29 = vst.msk [vmem:[%s1] sm:$0xff] %vm28, %v27
    // Predicated region
    $region10: #{tpu_custom_call.1} parent=1 // pred_check
      _
    $region11: #{tpu_custom_call.1} parent=1 // pred_check_branch
      %31 = sbr.rel (0) target = $region13
    $region12: #{tpu_custom_call.1} parent=1 // pred_region
      _
    $region13: #{tpu_custom_call.1} parent=1 // pred_fallthru
      _
    // Predicated region
    $region14: #{tpu_custom_call.1} parent=1 // pred_check
      _
    $region15: #{tpu_custom_call.1} parent=1 // pred_check_branch
      %33 = sbr.rel (0) target = $region17
    $region16: #{tpu_custom_call.1} parent=1 // pred_region
      _
    $region17: #{tpu_custom_call.1} parent=1 // pred_fallthru
      _
    %34 = vsyncpa [#allocation3], 1

</llo_original>
